<compile_context>
chip_gen: v5e
topology: v5e:2x2
jax: 0.10.0
libtpu: 0.0.40
codegen_flags: <defaults>
</compile_context>

<pallas_src>
import functools

import jax
import jax.numpy as jnp
from jax.experimental import pallas as pl
from jax.experimental.pallas import tpu as pltpu


def _round_up(n, m):
    return ((n + m - 1) // m) * m


# ----------------------------------------------------------------------------
# Fused Pallas kernel: SGConv (K hops) + Linear + log_softmax
# ----------------------------------------------------------------------------
def _sgc_kernel(x_ref, adj_ref, w_ref, b_ref, o_ref, *, k_hops, num_classes):
    adj = adj_ref[...]                                   # [Np, Np] (self loops included)
    x = x_ref[...]                                       # [Np, Fp]

    # Symmetric GCN normalisation; deg is the in-degree (row sum of adj[dst, src]).
    deg = jnp.sum(adj, axis=1, keepdims=True)            # [Np, 1]
    dinv = jnp.where(deg > 0.0, jax.lax.rsqrt(deg), 0.0)  # padded rows -> 0 (no NaN)

    # h = S^K x with S = D^-1/2 (A + I) D^-1/2, computed as K scaled matmuls.
    h = x
    for _ in range(k_hops):                               # K is tiny and static
        h = dinv * jnp.dot(adj, dinv * h,
                           preferred_element_type=jnp.float32)

    # Linear layer: single lane-dense MXU matmul + bias.
    logits = jnp.dot(h, w_ref[...], preferred_element_type=jnp.float32)
    logits = logits + b_ref[...]                          # [Np, Cp]

    # Mask the padded class columns, then row-wise log_softmax over real classes.
    col = jax.lax.broadcasted_iota(jnp.int32, logits.shape, 1)
    logits = jnp.where(col < num_classes, logits, -1e30)
    m = jnp.max(logits, axis=1, keepdims=True)
    lse = m + jnp.log(jnp.sum(jnp.exp(logits - m), axis=1, keepdims=True))
    o_ref[...] = logits - lse                             # single lane-dense store


# ----------------------------------------------------------------------------
# Wrapper: pads everything to (8, 128)-friendly tiles, one pallas_call, unpads.
# ----------------------------------------------------------------------------
def sgc_forward(x, adj, w, b, *, k_hops=2):
    n, f = x.shape
    c = w.shape[1]
    n_pad = _round_up(n, 128)     # N is both a sublane dim and a lane dim (adj cols)
    f_pad = _round_up(f, 128)
    c_pad = _round_up(c, 128)

    x_p = jnp.zeros((n_pad, f_pad), jnp.float32).at[:n, :f].set(x)
    adj_p = jnp.zeros((n_pad, n_pad), jnp.float32).at[:n, :n].set(adj)
    w_p = jnp.zeros((f_pad, c_pad), jnp.float32).at[:f, :c].set(w)
    b_p = jnp.zeros((1, c_pad), jnp.float32).at[:, :c].set(b)

    kernel = functools.partial(_sgc_kernel, k_hops=k_hops, num_classes=c)
    vmem = pl.BlockSpec(memory_space=pltpu.MemorySpace.VMEM)
    out = pl.pallas_call(
        kernel,
        out_shape=jax.ShapeDtypeStruct((n_pad, c_pad), jnp.float32),
        in_specs=[vmem] * 4,
        out_specs=vmem,
    )(x_p, adj_p, w_p, b_p)
    return out[:n, :c]


# ----------------------------------------------------------------------------
# Pure-JAX reference (for a numerical self-check)
# ----------------------------------------------------------------------------
def sgc_reference(x, adj, w, b, *, k_hops=2):
    deg = jnp.sum(adj, axis=1, keepdims=True)
    dinv = jnp.where(deg > 0.0, 1.0 / jnp.sqrt(deg), 0.0)
    h = x
    for _ in range(k_hops):
        h = dinv * (adj @ (dinv * h))
    logits = h @ w + b
    return jax.nn.log_softmax(logits, axis=1)


# ----------------------------------------------------------------------------
# Deterministic parameter init (glorot W, zero bias)
# ----------------------------------------------------------------------------
def _glorot(key, shape):
    fan_in, fan_out = shape[-2], shape[-1]
    limit = jnp.sqrt(6.0 / (fan_in + fan_out))
    return jax.random.uniform(key, shape, jnp.float32, -limit, limit)


# ----------------------------------------------------------------------------
if __name__ == "__main__":
    key = jax.random.PRNGKey(0)
    N, num_features, num_classes, K = 16, 8, 4, 2

    kx, kw = jax.random.split(key)
    x = jax.random.normal(kx, (N, num_features), jnp.float32)

    # Deterministic edge_index: a bidirectional ring plus a few chords.
    src = jnp.concatenate([
        jnp.arange(N), (jnp.arange(N) + 1) % N, jnp.array([0, 3, 5, 7]),
    ])
    dst = jnp.concatenate([
        (jnp.arange(N) + 1) % N, jnp.arange(N), jnp.array([8, 12, 1, 14]),
    ])
    # Dense adjacency mask adj[dst, src] = 1, plus self loops (add_self_loops=True).
    adj = jnp.zeros((N, N), jnp.float32).at[dst, src].set(1.0)
    adj = jnp.maximum(adj, jnp.eye(N, dtype=jnp.float32))

    # SGConv linear layer parameters (deterministic; torch.manual_seed init not reproduced).
    w = _glorot(kw, (num_features, num_classes))
    b = jnp.zeros((1, num_classes), jnp.float32)

    out = sgc_forward(x, adj, w, b, k_hops=K)
    out = jax.block_until_ready(out)

    assert out.shape == (N, num_classes)
    # rows of log_softmax should exp-sum to ~1
    assert jnp.allclose(jnp.sum(jnp.exp(out), axis=1), 1.0, atol=1e-4)
    # match the pure-JAX reference
    ref = sgc_reference(x, adj, w, b, k_hops=K)
    assert jnp.allclose(out, ref, atol=1e-5, rtol=1e-5)
    print("KERNEL_OK")
</pallas_src>

<mosaic_0001>
module attributes {stable_mosaic.version = 11 : i64} {
  func.func @_sgc_kernel(%arg0: memref<128x128xf32, #tpu.memory_space<vmem>>, %arg1: memref<128x128xf32, #tpu.memory_space<vmem>>, %arg2: memref<128x128xf32, #tpu.memory_space<vmem>>, %arg3: memref<1x128xf32, #tpu.memory_space<vmem>>, %arg4: memref<128x128xf32, #tpu.memory_space<vmem>>) attributes {dimension_semantics = [], scalar_prefetch = 0 : i64, scratch_operands = 0 : i64, tpu.core_type = #tpu.core_type<tc>} {
    %c0 = arith.constant 0 : index
    %c0_0 = arith.constant 0 : index
    %0 = vector.load %arg1[%c0, %c0_0] : memref<128x128xf32, #tpu.memory_space<vmem>>, vector<128x128xf32>
    %c0_1 = arith.constant 0 : index
    %c0_2 = arith.constant 0 : index
    %1 = vector.load %arg0[%c0_1, %c0_2] : memref<128x128xf32, #tpu.memory_space<vmem>>, vector<128x128xf32>
    %cst = arith.constant dense<0.000000e+00> : vector<128xf32>
    %2 = vector.multi_reduction <add>, %0, %cst [1] : vector<128x128xf32> to vector<128xf32>
    %3 = vector.shape_cast %2 : vector<128xf32> to vector<128x1xf32>
    %cst_3 = arith.constant 0.000000e+00 : f32
    %4 = vector.broadcast %cst_3 : f32 to vector<128x1xf32>
    %5 = arith.cmpf ogt, %3, %4 : vector<128x1xf32>
    %6 = math.rsqrt %3 : vector<128x1xf32>
    %cst_4 = arith.constant 0.000000e+00 : f32
    %7 = vector.broadcast %cst_4 : f32 to vector<128x1xf32>
    %8 = arith.select %5, %6, %7 : vector<128x1xi1>, vector<128x1xf32>
    %9 = vector.broadcast %8 : vector<128x1xf32> to vector<128x128xf32>
    %10 = arith.mulf %9, %1 : vector<128x128xf32>
    %cst_5 = arith.constant dense<0.000000e+00> : vector<128x128xf32>
    %11 = tpu.matmul %0, %10, %cst_5 {dimension_numbers = #tpu.dot_dimension_numbers<[1], [0], [0], [1], [0, 0, 1, 1], [], []>} : vector<128x128xf32>, vector<128x128xf32>, vector<128x128xf32> -> vector<128x128xf32>
    %12 = vector.broadcast %8 : vector<128x1xf32> to vector<128x128xf32>
    %13 = arith.mulf %12, %11 : vector<128x128xf32>
    %14 = vector.broadcast %8 : vector<128x1xf32> to vector<128x128xf32>
    %15 = arith.mulf %14, %13 : vector<128x128xf32>
    %cst_6 = arith.constant dense<0.000000e+00> : vector<128x128xf32>
    %16 = tpu.matmul %0, %15, %cst_6 {dimension_numbers = #tpu.dot_dimension_numbers<[1], [0], [0], [1], [0, 0, 1, 1], [], []>} : vector<128x128xf32>, vector<128x128xf32>, vector<128x128xf32> -> vector<128x128xf32>
    %17 = vector.broadcast %8 : vector<128x1xf32> to vector<128x128xf32>
    %18 = arith.mulf %17, %16 : vector<128x128xf32>
    %c0_7 = arith.constant 0 : index
    %c0_8 = arith.constant 0 : index
    %19 = vector.load %arg2[%c0_7, %c0_8] : memref<128x128xf32, #tpu.memory_space<vmem>>, vector<128x128xf32>
    %cst_9 = arith.constant dense<0.000000e+00> : vector<128x128xf32>
    %20 = tpu.matmul %18, %19, %cst_9 {dimension_numbers = #tpu.dot_dimension_numbers<[1], [0], [0], [1], [0, 0, 1, 1], [], []>} : vector<128x128xf32>, vector<128x128xf32>, vector<128x128xf32> -> vector<128x128xf32>
    %c0_10 = arith.constant 0 : index
    %c0_11 = arith.constant 0 : index
    %21 = vector.load %arg3[%c0_10, %c0_11] : memref<1x128xf32, #tpu.memory_space<vmem>>, vector<1x128xf32>
    %22 = vector.broadcast %21 : vector<1x128xf32> to vector<128x128xf32>
    %23 = arith.addf %20, %22 : vector<128x128xf32>
    %24 = tpu.iota {dimensions = array<i32: 1>} : vector<128x128xi32>
    %c4_i32 = arith.constant 4 : i32
    %25 = vector.broadcast %c4_i32 : i32 to vector<128x128xi32>
    %26 = arith.cmpi slt, %24, %25 : vector<128x128xi32>
    %cst_12 = arith.constant -1.000000e+30 : f32
    %27 = vector.broadcast %cst_12 : f32 to vector<128x128xf32>
    %28 = arith.select %26, %23, %27 : vector<128x128xi1>, vector<128x128xf32>
    %cst_13 = arith.constant dense<0xFF800000> : vector<128xf32>
    %29 = vector.multi_reduction <maximumf>, %28, %cst_13 [1] : vector<128x128xf32> to vector<128xf32>
    %30 = vector.shape_cast %29 : vector<128xf32> to vector<128x1xf32>
    %31 = vector.broadcast %30 : vector<128x1xf32> to vector<128x128xf32>
    %32 = arith.subf %28, %31 : vector<128x128xf32>
    %33 = math.exp %32 : vector<128x128xf32>
    %cst_14 = arith.constant dense<0.000000e+00> : vector<128xf32>
    %34 = vector.multi_reduction <add>, %33, %cst_14 [1] : vector<128x128xf32> to vector<128xf32>
    %35 = vector.shape_cast %34 : vector<128xf32> to vector<128x1xf32>
    %36 = math.log %35 : vector<128x1xf32>
    %37 = arith.addf %30, %36 : vector<128x1xf32>
    %38 = vector.broadcast %37 : vector<128x1xf32> to vector<128x128xf32>
    %39 = arith.subf %28, %38 : vector<128x128xf32>
    %c0_15 = arith.constant 0 : index
    %c0_16 = arith.constant 0 : index
    %40 = vector.load %arg4[%c0_15, %c0_16] : memref<128x128xf32, #tpu.memory_space<vmem>>, vector<128x128xf32>
    tpu.vector_store %arg4[%c0_15, %c0_16], %39 {strides = array<i32>} : memref<128x128xf32, #tpu.memory_space<vmem>>, vector<128x128xf32>,
    return
  }
}

</mosaic_0001>

<llo_original>
// kernel: tpu_custom_call.1
$region0: #{tpu_custom_call.1}
  #allocation0 [shape = 'u32[]', space=smem, size = 0x4, offset = 0x4, fixed_abs, tag = 'smem constant byte address 0x4 - core index']
  #allocation1 [shape = 'u32[72,128]{1,0:T(1,128)}', space=vmem, size = 0x9000, scoped, tag = 'internal scratch']
  %s0 = inlined_call_operand.hbm [shape: f32[128,128], index: 0, kind: input, shape index: {}]
  %s1 = inlined_call_operand.hbm [shape: f32[128,128], index: 1, kind: input, shape index: {}]
  %s2 = inlined_call_operand.hbm [shape: f32[128,128], index: 2, kind: input, shape index: {}]
  %s3 = inlined_call_operand.vmem [shape: f32[1,128], index: 3, kind: input, shape index: {}]
  %s4 = inlined_call_operand.hbm [shape: f32[128,128], index: 4, kind: output, shape index: {}]
  %s5 = sld [smem:[#allocation0]]
  $region38: #{tpu_custom_call.1} parent=0
    _
  %s7 = ssub.s32 1, %s5
  %s8 = scalar_select 0, %s7, %s5
  $region1: #{tpu_custom_call.1} parent=0
    #allocation2 [shape = 'u8[65536]{0}', space=vmem, size = 0x10000, scoped, tag = 'input window, operand 0, single buffered']
    #allocation3 [shape = 's32[1]{0}', space=sflag, size = 0x4, scoped, tag = 'scoped memory for tpu_custom_call.1']
    #allocation4 [shape = 's32[1]{0}', space=sflag, size = 0x4, scoped, tag = 'scoped memory for tpu_custom_call.1']
    #allocation5 [shape = 'u8[65536]{0}', space=vmem, size = 0x10000, scoped, tag = 'input window, operand 1, single buffered']
    #allocation6 [shape = 's32[1]{0}', space=sflag, size = 0x4, scoped, tag = 'scoped memory for tpu_custom_call.1']
    #allocation7 [shape = 'u8[65536]{0}', space=vmem, size = 0x10000, scoped, tag = 'input window, operand 2, single buffered']
    #allocation8 [shape = 'u8[65536]{0}', space=vmem, size = 0x10000, scoped, tag = 'output window, operand 0, single buffered']
    %9 = vsyncpa [#allocation3], 0
    %10 = vsyncpa [#allocation6], 0
    %11 = vsyncpa [#allocation4], 0
    // Predicated region
    $region2: #{tpu_custom_call.1} parent=1 // pred_check
      _
    $region3: #{tpu_custom_call.1} parent=1 // pred_check_branch
      %13 = sbr.rel (0) target = $region5
    $region4: #{tpu_custom_call.1} parent=1 // pred_region
      %15 = vsyncadd [#allocation3], 0
      %s16 = sshll.u32 %s0, 4
      %s17 = int_to_ptr.hbm [resolvable:$true] %s16
      %s18 = sshll.u32 [#allocation2], 4
      %s19 = int_to_ptr.vmem [resolvable:$true] %s18
      %24 = dma.hbm_to_vmem [thread:$0]  %s17, 2048, %s19, [#allocation3], 128, 128, 8
    $region5: #{tpu_custom_call.1} parent=1 // pred_fallthru
      _
    // Predicated region
    $region6: #{tpu_custom_call.1} parent=1 // pred_check
      _
    $region7: #{tpu_custom_call.1} parent=1 // pred_check_branch
      %26 = sbr.rel (0) target = $region9
    $region8: #{tpu_custom_call.1} parent=1 // pred_region
      %28 = vsyncadd [#allocation6], 0
      %s29 = sshll.u32 %s1, 4
      %s30 = int_to_ptr.hbm [resolvable:$true] %s29
      %s31 = sshll.u32 [#allocation5], 4
      %s32 = int_to_ptr.vmem [resolvable:$true] %s31
      %37 = dma.hbm_to_vmem [thread:$0]  %s30, 2048, %s32, [#allocation6], 128, 128, 8
    $region9: #{tpu_custom_call.1} parent=1 // pred_fallthru
      _
    // Predicated region
    $region10: #{tpu_custom_call.1} parent=1 // pred_check
      _
    $region11: #{tpu_custom_call.1} parent=1 // pred_check_branch
      %39 = sbr.rel (0) target = $region13
    $region12: #{tpu_custom_call.1} parent=1 // pred_region
      %41 = vsyncadd [#allocation6], 0
      %s42 = sshll.u32 %s2, 4
      %s43 = int_to_ptr.hbm [resolvable:$true] %s42
      %s44 = sshll.u32 [#allocation7], 4
      %s45 = int_to_ptr.vmem [resolvable:$true] %s44
      %50 = dma.hbm_to_vmem [thread:$0]  %s43, 2048, %s45, [#allocation6], 128, 128, 8
    $region13: #{tpu_custom_call.1} parent=1 // pred_fallthru
      _
    // Predicated region
    $region14: #{tpu_custom_call.1} parent=1 // pred_check
      _
    $region15: #{tpu_custom_call.1} parent=1 // pred_check_branch
      %52 = sbr.rel (0) target = $region17
    $region16: #{tpu_custom_call.1} parent=1 // pred_region
      _
    $region17: #{tpu_custom_call.1} parent=1 // pred_fallthru
      _
    // Predicated region
    $region18: #{tpu_custom_call.1} parent=1 // pred_check
      _
    $region19: #{tpu_custom_call.1} parent=1 // pred_check_branch
      %54 = sbr.rel (0) target = $region21
    $region20: #{tpu_custom_call.1} parent=1 // pred_region
      %56 = dma.done [#allocation3], 2048
    $region21: #{tpu_custom_call.1} parent=1 // pred_fallthru
      _
    // Predicated region
    $region22: #{tpu_custom_call.1} parent=1 // pred_check
      _
    $region23: #{tpu_custom_call.1} parent=1 // pred_check_branch
      %58 = sbr.rel (0) target = $region25
    $region24: #{tpu_custom_call.1} parent=1 // pred_region
      %60 = dma.done [#allocation6], 2048
    $region25: #{tpu_custom_call.1} parent=1 // pred_fallthru
      _
    // Predicated region
    $region26: #{tpu_custom_call.1} parent=1 // pred_check
      _
    $region27: #{tpu_custom_call.1} parent=1 // pred_check_branch
      %62 = sbr.rel (0) target = $region29
    $region28: #{tpu_custom_call.1} parent=1 // pred_region
      %64 = dma.done [#allocation6], 2048
    $region29: #{tpu_custom_call.1} parent=1 // pred_fallthru
      _
    %v65 = vld [vmem:[#allocation5] sm:$0xff]
    %v66 = vld [vmem:[#allocation5 + $0x8] sm:$0xff]
    %v67 = vld [vmem:[#allocation5 + $0x10] sm:$0xff]
    %v68 = vld [vmem:[#allocation5 + $0x18] sm:$0xff]
    %v69 = vld [vmem:[#allocation5 + $0x20] sm:$0xff]
    %v70 = vld [vmem:[#allocation5 + $0x28] sm:$0xff]
    %v71 = vld [vmem:[#allocation5 + $0x30] sm:$0xff]
    %v72 = vld [vmem:[#allocation5 + $0x38] sm:$0xff]
    %v73 = vld [vmem:[#allocation5 + $0x40] sm:$0xff]
    %v74 = vld [vmem:[#allocation5 + $0x48] sm:$0xff]
    %v75 = vld [vmem:[#allocation5 + $0x50] sm:$0xff]
    %v76 = vld [vmem:[#allocation5 + $0x58] sm:$0xff]
    %v77 = vld [vmem:[#allocation5 + $0x60] sm:$0xff]
    %v78 = vld [vmem:[#allocation5 + $0x68] sm:$0xff]
    %v79 = vld [vmem:[#allocation5 + $0x70] sm:$0xff]
    %v80 = vld [vmem:[#allocation5 + $0x78] sm:$0xff]
    %v81 = vld [vmem:[#allocation2] sm:$0xff]
    %v82 = vld [vmem:[#allocation2 + $0x8] sm:$0xff]
    %v83 = vld [vmem:[#allocation2 + $0x10] sm:$0xff]
    %v84 = vld [vmem:[#allocation2 + $0x18] sm:$0xff]
    %v85 = vld [vmem:[#allocation2 + $0x20] sm:$0xff]
    %v86 = vld [vmem:[#allocation2 + $0x28] sm:$0xff]
    %v87 = vld [vmem:[#allocation2 + $0x30] sm:$0xff]
    %v88 = vld [vmem:[#allocation2 + $0x38] sm:$0xff]
    %v89 = vld [vmem:[#allocation2 + $0x40] sm:$0xff]
    %v90 = vld [vmem:[#allocation2 + $0x48] sm:$0xff]
    %v91 = vld [vmem:[#allocation2 + $0x50] sm:$0xff]
    %v92 = vld [vmem:[#allocation2 + $0x58] sm:$0xff]
    %v93 = vld [vmem:[#allocation2 + $0x60] sm:$0xff]
    %v94 = vld [vmem:[#allocation2 + $0x68] sm:$0xff]
    %v95 = vld [vmem:[#allocation2 + $0x70] sm:$0xff]
    %v96 = vld [vmem:[#allocation2 + $0x78] sm:$0xff]
    %97 = vadd.xlane.f32.xlu0 %v65
    %v98 = vpop.xlane.xlu0 %97
    %99 = vadd.xlane.f32.xlu0 %v66
    %v100 = vpop.xlane.xlu0 %99
    %101 = vadd.xlane.f32.xlu0 %v67
    %v102 = vpop.xlane.xlu0 %101
    %103 = vadd.xlane.f32.xlu0 %v68
    %v104 = vpop.xlane.xlu0 %103
    %105 = vadd.xlane.f32.xlu0 %v69
    %v106 = vpop.xlane.xlu0 %105
    %107 = vadd.xlane.f32.xlu0 %v70
    %v108 = vpop.xlane.xlu0 %107
    %109 = vadd.xlane.f32.xlu0 %v71
    %v110 = vpop.xlane.xlu0 %109
    %111 = vadd.xlane.f32.xlu0 %v72
    %v112 = vpop.xlane.xlu0 %111
    %113 = vadd.xlane.f32.xlu0 %v73
    %v114 = vpop.xlane.xlu0 %113
    %115 = vadd.xlane.f32.xlu0 %v74
    %v116 = vpop.xlane.xlu0 %115
    %117 = vadd.xlane.f32.xlu0 %v75
    %v118 = vpop.xlane.xlu0 %117
    %119 = vadd.xlane.f32.xlu0 %v76
    %v120 = vpop.xlane.xlu0 %119
    %121 = vadd.xlane.f32.xlu0 %v77
    %v122 = vpop.xlane.xlu0 %121
    %123 = vadd.xlane.f32.xlu0 %v78
    %v124 = vpop.xlane.xlu0 %123
    %125 = vadd.xlane.f32.xlu0 %v79
    %v126 = vpop.xlane.xlu0 %125
    %127 = vadd.xlane.f32.xlu0 %v80
    %v128 = vpop.xlane.xlu0 %127
    %vm129 = vcmp.gt.f32.partialorder %v98, 0.0
    %vm130 = vcmp.gt.f32.partialorder %v100, 0.0
    %vm131 = vcmp.gt.f32.partialorder %v102, 0.0
    %vm132 = vcmp.gt.f32.partialorder %v104, 0.0
    %vm133 = vcmp.gt.f32.partialorder %v106, 0.0
    %vm134 = vcmp.gt.f32.partialorder %v108, 0.0
    %vm135 = vcmp.gt.f32.partialorder %v110, 0.0
    %vm136 = vcmp.gt.f32.partialorder %v112, 0.0
    %vm137 = vcmp.gt.f32.partialorder %v114, 0.0
    %vm138 = vcmp.gt.f32.partialorder %v116, 0.0
    %vm139 = vcmp.gt.f32.partialorder %v118, 0.0
    %vm140 = vcmp.gt.f32.partialorder %v120, 0.0
    %vm141 = vcmp.gt.f32.partialorder %v122, 0.0
    %vm142 = vcmp.gt.f32.partialorder %v124, 0.0
    %vm143 = vcmp.gt.f32.partialorder %v126, 0.0
    %vm144 = vcmp.gt.f32.partialorder %v128, 0.0
    %v145 = vrsqrt.pop %v98
    %v146 = vmul.f32 %v145, %v98
    %v147 = vmul.f32 %v146, %v145
    %v148 = vmul.f32 0.5, %v147
    %v149 = vsub.f32 1.5, %v148
    %v150 = vmul.f32 %v145, %v149
    %vm151 = vweird.f32 %v98
    %vm152 = vweird.f32 %v145
    %vm153 = vmor %vm151, %vm152
    %v154 = vsel %vm153, %v145, %v150
    %v155 = vrsqrt.pop %v100
    %v156 = vmul.f32 %v155, %v100
    %v157 = vmul.f32 %v156, %v155
    %v158 = vmul.f32 0.5, %v157
    %v159 = vsub.f32 1.5, %v158
    %v160 = vmul.f32 %v155, %v159
    %vm161 = vweird.f32 %v100
    %vm162 = vweird.f32 %v155
    %vm163 = vmor %vm161, %vm162
    %v164 = vsel %vm163, %v155, %v160
    %v165 = vrsqrt.pop %v102
    %v166 = vmul.f32 %v165, %v102
    %v167 = vmul.f32 %v166, %v165
    %v168 = vmul.f32 0.5, %v167
    %v169 = vsub.f32 1.5, %v168
    %v170 = vmul.f32 %v165, %v169
    %vm171 = vweird.f32 %v102
    %vm172 = vweird.f32 %v165
    %vm173 = vmor %vm171, %vm172
    %v174 = vsel %vm173, %v165, %v170
    %v175 = vrsqrt.pop %v104
    %v176 = vmul.f32 %v175, %v104
    %v177 = vmul.f32 %v176, %v175
    %v178 = vmul.f32 0.5, %v177
    %v179 = vsub.f32 1.5, %v178
    %v180 = vmul.f32 %v175, %v179
    %vm181 = vweird.f32 %v104
    %vm182 = vweird.f32 %v175
    %vm183 = vmor %vm181, %vm182
    %v184 = vsel %vm183, %v175, %v180
    %v185 = vrsqrt.pop %v106
    %v186 = vmul.f32 %v185, %v106
    %v187 = vmul.f32 %v186, %v185
    %v188 = vmul.f32 0.5, %v187
    %v189 = vsub.f32 1.5, %v188
    %v190 = vmul.f32 %v185, %v189
    %vm191 = vweird.f32 %v106
    %vm192 = vweird.f32 %v185
    %vm193 = vmor %vm191, %vm192
    %v194 = vsel %vm193, %v185, %v190
    %v195 = vrsqrt.pop %v108
    %v196 = vmul.f32 %v195, %v108
    %v197 = vmul.f32 %v196, %v195
    %v198 = vmul.f32 0.5, %v197
    %v199 = vsub.f32 1.5, %v198
    %v200 = vmul.f32 %v195, %v199
    %vm201 = vweird.f32 %v108
    %vm202 = vweird.f32 %v195
    %vm203 = vmor %vm201, %vm202
    %v204 = vsel %vm203, %v195, %v200
    %v205 = vrsqrt.pop %v110
    %v206 = vmul.f32 %v205, %v110
    %v207 = vmul.f32 %v206, %v205
    %v208 = vmul.f32 0.5, %v207
    %v209 = vsub.f32 1.5, %v208
    %v210 = vmul.f32 %v205, %v209
    %vm211 = vweird.f32 %v110
    %vm212 = vweird.f32 %v205
    %vm213 = vmor %vm211, %vm212
    %v214 = vsel %vm213, %v205, %v210
    %v215 = vrsqrt.pop %v112
    %v216 = vmul.f32 %v215, %v112
    %v217 = vmul.f32 %v216, %v215
    %v218 = vmul.f32 0.5, %v217
    %v219 = vsub.f32 1.5, %v218
    %v220 = vmul.f32 %v215, %v219
    %vm221 = vweird.f32 %v112
    %vm222 = vweird.f32 %v215
    %vm223 = vmor %vm221, %vm222
    %v224 = vsel %vm223, %v215, %v220
    %v225 = vrsqrt.pop %v114
    %v226 = vmul.f32 %v225, %v114
    %v227 = vmul.f32 %v226, %v225
    %v228 = vmul.f32 0.5, %v227
    %v229 = vsub.f32 1.5, %v228
    %v230 = vmul.f32 %v225, %v229
    %vm231 = vweird.f32 %v114
    %vm232 = vweird.f32 %v225
    %vm233 = vmor %vm231, %vm232
    %v234 = vsel %vm233, %v225, %v230
    %v235 = vrsqrt.pop %v116
    %v236 = vmul.f32 %v235, %v116
    %v237 = vmul.f32 %v236, %v235
    %v238 = vmul.f32 0.5, %v237
    %v239 = vsub.f32 1.5, %v238
    %v240 = vmul.f32 %v235, %v239
    %vm241 = vweird.f32 %v116
    %vm242 = vweird.f32 %v235
    %vm243 = vmor %vm241, %vm242
    %v244 = vsel %vm243, %v235, %v240
    %v245 = vrsqrt.pop %v118
    %v246 = vmul.f32 %v245, %v118
    %v247 = vmul.f32 %v246, %v245
    %v248 = vmul.f32 0.5, %v247
    %v249 = vsub.f32 1.5, %v248
    %v250 = vmul.f32 %v245, %v249
    %vm251 = vweird.f32 %v118
    %vm252 = vweird.f32 %v245
    %vm253 = vmor %vm251, %vm252
    %v254 = vsel %vm253, %v245, %v250
    %v255 = vrsqrt.pop %v120
    %v256 = vmul.f32 %v255, %v120
    %v257 = vmul.f32 %v256, %v255
    %v258 = vmul.f32 0.5, %v257
    %v259 = vsub.f32 1.5, %v258
    %v260 = vmul.f32 %v255, %v259
    %vm261 = vweird.f32 %v120
    %vm262 = vweird.f32 %v255
    %vm263 = vmor %vm261, %vm262
    %v264 = vsel %vm263, %v255, %v260
    %v265 = vrsqrt.pop %v122
    %v266 = vmul.f32 %v265, %v122
    %v267 = vmul.f32 %v266, %v265
    %v268 = vmul.f32 0.5, %v267
    %v269 = vsub.f32 1.5, %v268
    %v270 = vmul.f32 %v265, %v269
    %vm271 = vweird.f32 %v122
    %vm272 = vweird.f32 %v265
    %vm273 = vmor %vm271, %vm272
    %v274 = vsel %vm273, %v265, %v270
    %v275 = vrsqrt.pop %v124
    %v276 = vmul.f32 %v275, %v124
    %v277 = vmul.f32 %v276, %v275
    %v278 = vmul.f32 0.5, %v277
    %v279 = vsub.f32 1.5, %v278
    %v280 = vmul.f32 %v275, %v279
    %vm281 = vweird.f32 %v124
    %vm282 = vweird.f32 %v275
    %vm283 = vmor %vm281, %vm282
    %v284 = vsel %vm283, %v275, %v280
    %v285 = vrsqrt.pop %v126
    %v286 = vmul.f32 %v285, %v126
    %v287 = vmul.f32 %v286, %v285
    %v288 = vmul.f32 0.5, %v287
    %v289 = vsub.f32 1.5, %v288
    %v290 = vmul.f32 %v285, %v289
    %vm291 = vweird.f32 %v126
    %vm292 = vweird.f32 %v285
    %vm293 = vmor %vm291, %vm292
    %v294 = vsel %vm293, %v285, %v290
    %v295 = vrsqrt.pop %v128
    %v296 = vmul.f32 %v295, %v128
    %v297 = vmul.f32 %v296, %v295
    %v298 = vmul.f32 0.5, %v297
    %v299 = vsub.f32 1.5, %v298
    %v300 = vmul.f32 %v295, %v299
    %vm301 = vweird.f32 %v128
    %vm302 = vweird.f32 %v295
    %vm303 = vmor %vm301, %vm302
    %v304 = vsel %vm303, %v295, %v300
    %v305 = vsel %vm129, %v154, 0.0
    %v306 = vsel %vm130, %v164, 0.0
    %v307 = vsel %vm131, %v174, 0.0
    %v308 = vsel %vm132, %v184, 0.0
    %v309 = vsel %vm133, %v194, 0.0
    %v310 = vsel %vm134, %v204, 0.0
    %v311 = vsel %vm135, %v214, 0.0
    %v312 = vsel %vm136, %v224, 0.0
    %v313 = vsel %vm137, %v234, 0.0
    %v314 = vsel %vm138, %v244, 0.0
    %v315 = vsel %vm139, %v254, 0.0
    %v316 = vsel %vm140, %v264, 0.0
    %v317 = vsel %vm141, %v274, 0.0
    %v318 = vsel %vm142, %v284, 0.0
    %v319 = vsel %vm143, %v294, 0.0
    %v320 = vsel %vm144, %v304, 0.0
    %v321 = vmul.f32 %v305, %v81
    %v322 = vmul.f32 %v306, %v82
    %v323 = vmul.f32 %v307, %v83
    %v324 = vmul.f32 %v308, %v84
    %v325 = vmul.f32 %v309, %v85
    %v326 = vmul.f32 %v310, %v86
    %v327 = vmul.f32 %v311, %v87
    %v328 = vmul.f32 %v312, %v88
    %v329 = vmul.f32 %v313, %v89
    %v330 = vmul.f32 %v314, %v90
    %v331 = vmul.f32 %v315, %v91
    %v332 = vmul.f32 %v316, %v92
    %v333 = vmul.f32 %v317, %v93
    %v334 = vmul.f32 %v318, %v94
    %v335 = vmul.f32 %v319, %v95
    %v336 = vmul.f32 %v320, %v96
    %337 = vmatpush.msra.mxu0 %v336
    %338 = vmatpush.msra.mxu0 %v335
    %339 = vmatpush.msra.mxu0 %v334
    %340 = vmatpush.msra.mxu0 %v333
    %341 = vmatpush.msra.mxu0 %v332
    %342 = vmatpush.msra.mxu0 %v331
    %343 = vmatpush.msra.mxu0 %v330
    %344 = vmatpush.msra.mxu0 %v329
    %345 = vmatpush.msra.mxu0 %v328
    %346 = vmatpush.msra.mxu0 %v327
    %347 = vmatpush.msra.mxu0 %v326
    %348 = vmatpush.msra.mxu0 %v325
    %349 = vmatpush.msra.mxu0 %v324
    %350 = vmatpush.msra.mxu0 %v323
    %351 = vmatpush.msra.mxu0 %v322
    %352 = vmatpush.msra.mxu0 %v321
    %353 = vmatmul.f32.gmra.mxu0 %v65
    %v354 = vpop.f32.mrf.mxu0
    %v355 = vadd.f32 0.0, %v354
    %356 = vmatmul.f32.gmra.mxu0 %v66
    %v357 = vpop.f32.mrf.mxu0
    %v358 = vadd.f32 0.0, %v357
    %359 = vmatmul.f32.gmra.mxu0 %v67
    %v360 = vpop.f32.mrf.mxu0
    %v361 = vadd.f32 0.0, %v360
    %362 = vmatmul.f32.gmra.mxu0 %v68
    %v363 = vpop.f32.mrf.mxu0
    %v364 = vadd.f32 0.0, %v363
    %365 = vmatmul.f32.gmra.mxu0 %v69
    %v366 = vpop.f32.mrf.mxu0
    %v367 = vadd.f32 0.0, %v366
    %368 = vmatmul.f32.gmra.mxu0 %v70
    %v369 = vpop.f32.mrf.mxu0
    %v370 = vadd.f32 0.0, %v369
    %371 = vmatmul.f32.gmra.mxu0 %v71
    %v372 = vpop.f32.mrf.mxu0
    %v373 = vadd.f32 0.0, %v372
    %374 = vmatmul.f32.gmra.mxu0 %v72
    %v375 = vpop.f32.mrf.mxu0
    %v376 = vadd.f32 0.0, %v375
    %377 = vmatmul.f32.gmra.mxu0 %v73
    %v378 = vpop.f32.mrf.mxu0
    %v379 = vadd.f32 0.0, %v378
    %380 = vmatmul.f32.gmra.mxu0 %v74
    %v381 = vpop.f32.mrf.mxu0
    %v382 = vadd.f32 0.0, %v381
    %383 = vmatmul.f32.gmra.mxu0 %v75
    %v384 = vpop.f32.mrf.mxu0
    %v385 = vadd.f32 0.0, %v384
    %386 = vmatmul.f32.gmra.mxu0 %v76
    %v387 = vpop.f32.mrf.mxu0
    %v388 = vadd.f32 0.0, %v387
    %389 = vmatmul.f32.gmra.mxu0 %v77
    %v390 = vpop.f32.mrf.mxu0
    %v391 = vadd.f32 0.0, %v390
    %392 = vmatmul.f32.gmra.mxu0 %v78
    %v393 = vpop.f32.mrf.mxu0
    %v394 = vadd.f32 0.0, %v393
    %395 = vmatmul.f32.gmra.mxu0 %v79
    %v396 = vpop.f32.mrf.mxu0
    %v397 = vadd.f32 0.0, %v396
    %398 = vmatmul.f32.gmra.mxu0 %v80
    %v399 = vpop.f32.mrf.mxu0
    %v400 = vadd.f32 0.0, %v399
    %401 = vdwg.mxu0
    %v402 = vmul.f32 %v305, %v355
    %v403 = vmul.f32 %v306, %v358
    %v404 = vmul.f32 %v307, %v361
    %v405 = vmul.f32 %v308, %v364
    %v406 = vmul.f32 %v309, %v367
    %v407 = vmul.f32 %v310, %v370
    %v408 = vmul.f32 %v311, %v373
    %v409 = vmul.f32 %v312, %v376
    %v410 = vmul.f32 %v313, %v379
    %v411 = vmul.f32 %v314, %v382
    %v412 = vmul.f32 %v315, %v385
    %v413 = vmul.f32 %v316, %v388
    %v414 = vmul.f32 %v317, %v391
    %v415 = vmul.f32 %v318, %v394
    %v416 = vmul.f32 %v319, %v397
    %v417 = vmul.f32 %v320, %v400
    %v418 = vmul.f32 %v305, %v402
    %v419 = vmul.f32 %v306, %v403
    %v420 = vmul.f32 %v307, %v404
    %v421 = vmul.f32 %v308, %v405
    %v422 = vmul.f32 %v309, %v406
    %v423 = vmul.f32 %v310, %v407
    %v424 = vmul.f32 %v311, %v408
    %v425 = vmul.f32 %v312, %v409
    %v426 = vmul.f32 %v313, %v410
    %v427 = vmul.f32 %v314, %v411
    %v428 = vmul.f32 %v315, %v412
    %v429 = vmul.f32 %v316, %v413
    %v430 = vmul.f32 %v317, %v414
    %v431 = vmul.f32 %v318, %v415
    %v432 = vmul.f32 %v319, %v416
    %v433 = vmul.f32 %v320, %v417
    %434 = vmatpush.msra.mxu0 %v433
    %435 = vmatpush.msra.mxu0 %v432
    %436 = vmatpush.msra.mxu0 %v431
    %437 = vmatpush.msra.mxu0 %v430
    %438 = vmatpush.msra.mxu0 %v429
    %439 = vmatpush.msra.mxu0 %v428
    %440 = vmatpush.msra.mxu0 %v427
    %441 = vmatpush.msra.mxu0 %v426
    %442 = vmatpush.msra.mxu0 %v425
    %443 = vmatpush.msra.mxu0 %v424
    %444 = vmatpush.msra.mxu0 %v423
    %445 = vmatpush.msra.mxu0 %v422
    %446 = vmatpush.msra.mxu0 %v421
    %447 = vmatpush.msra.mxu0 %v420
    %448 = vmatpush.msra.mxu0 %v419
    %449 = vmatpush.msra.mxu0 %v418
    %450 = vmatmul.f32.gmra.mxu0 %v65
    %v451 = vpop.f32.mrf.mxu0
    %v452 = vadd.f32 0.0, %v451
    %453 = vmatmul.f32.gmra.mxu0 %v66
    %v454 = vpop.f32.mrf.mxu0
    %v455 = vadd.f32 0.0, %v454
    %456 = vmatmul.f32.gmra.mxu0 %v67
    %v457 = vpop.f32.mrf.mxu0
    %v458 = vadd.f32 0.0, %v457
    %459 = vmatmul.f32.gmra.mxu0 %v68
    %v460 = vpop.f32.mrf.mxu0
    %v461 = vadd.f32 0.0, %v460
    %462 = vmatmul.f32.gmra.mxu0 %v69
    %v463 = vpop.f32.mrf.mxu0
    %v464 = vadd.f32 0.0, %v463
    %465 = vmatmul.f32.gmra.mxu0 %v70
    %v466 = vpop.f32.mrf.mxu0
    %v467 = vadd.f32 0.0, %v466
    %468 = vmatmul.f32.gmra.mxu0 %v71
    %v469 = vpop.f32.mrf.mxu0
    %v470 = vadd.f32 0.0, %v469
    %471 = vmatmul.f32.gmra.mxu0 %v72
    %v472 = vpop.f32.mrf.mxu0
    %v473 = vadd.f32 0.0, %v472
    %474 = vmatmul.f32.gmra.mxu0 %v73
    %v475 = vpop.f32.mrf.mxu0
    %v476 = vadd.f32 0.0, %v475
    %477 = vmatmul.f32.gmra.mxu0 %v74
    %v478 = vpop.f32.mrf.mxu0
    %v479 = vadd.f32 0.0, %v478
    %480 = vmatmul.f32.gmra.mxu0 %v75
    %v481 = vpop.f32.mrf.mxu0
    %v482 = vadd.f32 0.0, %v481
    %483 = vmatmul.f32.gmra.mxu0 %v76
    %v484 = vpop.f32.mrf.mxu0
    %v485 = vadd.f32 0.0, %v484
    %486 = vmatmul.f32.gmra.mxu0 %v77
    %v487 = vpop.f32.mrf.mxu0
    %v488 = vadd.f32 0.0, %v487
    %489 = vmatmul.f32.gmra.mxu0 %v78
    %v490 = vpop.f32.mrf.mxu0
    %v491 = vadd.f32 0.0, %v490
    %492 = vmatmul.f32.gmra.mxu0 %v79
    %v493 = vpop.f32.mrf.mxu0
    %v494 = vadd.f32 0.0, %v493
    %495 = vmatmul.f32.gmra.mxu0 %v80
    %v496 = vpop.f32.mrf.mxu0
    %v497 = vadd.f32 0.0, %v496
    %498 = vdwg.mxu0
    %v499 = vmul.f32 %v305, %v452
    %v500 = vmul.f32 %v306, %v455
    %v501 = vmul.f32 %v307, %v458
    %v502 = vmul.f32 %v308, %v461
    %v503 = vmul.f32 %v309, %v464
    %v504 = vmul.f32 %v310, %v467
    %v505 = vmul.f32 %v311, %v470
    %v506 = vmul.f32 %v312, %v473
    %v507 = vmul.f32 %v313, %v476
    %v508 = vmul.f32 %v314, %v479
    %v509 = vmul.f32 %v315, %v482
    %v510 = vmul.f32 %v316, %v485
    %v511 = vmul.f32 %v317, %v488
    %v512 = vmul.f32 %v318, %v491
    %v513 = vmul.f32 %v319, %v494
    %v514 = vmul.f32 %v320, %v497
    %v515 = vld [vmem:[#allocation7] sm:$0xff]
    %v516 = vld [vmem:[#allocation7 + $0x8] sm:$0xff]
    %v517 = vld [vmem:[#allocation7 + $0x10] sm:$0xff]
    %v518 = vld [vmem:[#allocation7 + $0x18] sm:$0xff]
    %v519 = vld [vmem:[#allocation7 + $0x20] sm:$0xff]
    %v520 = vld [vmem:[#allocation7 + $0x28] sm:$0xff]
    %v521 = vld [vmem:[#allocation7 + $0x30] sm:$0xff]
    %v522 = vld [vmem:[#allocation7 + $0x38] sm:$0xff]
    %v523 = vld [vmem:[#allocation7 + $0x40] sm:$0xff]
    %v524 = vld [vmem:[#allocation7 + $0x48] sm:$0xff]
    %v525 = vld [vmem:[#allocation7 + $0x50] sm:$0xff]
    %v526 = vld [vmem:[#allocation7 + $0x58] sm:$0xff]
    %v527 = vld [vmem:[#allocation7 + $0x60] sm:$0xff]
    %v528 = vld [vmem:[#allocation7 + $0x68] sm:$0xff]
    %v529 = vld [vmem:[#allocation7 + $0x70] sm:$0xff]
    %v530 = vld [vmem:[#allocation7 + $0x78] sm:$0xff]
    %v531 = vld [vmem:[%s3] sm:$0x1]
    %v533 = vperm.slane %v531, 0
    %535 = vmatpush.msra.mxu0 %v530
    %536 = vmatpush.msra.mxu0 %v529
    %537 = vmatpush.msra.mxu0 %v528
    %538 = vmatpush.msra.mxu0 %v527
    %539 = vmatpush.msra.mxu0 %v526
    %540 = vmatpush.msra.mxu0 %v525
    %541 = vmatpush.msra.mxu0 %v524
    %542 = vmatpush.msra.mxu0 %v523
    %543 = vmatpush.msra.mxu0 %v522
    %544 = vmatpush.msra.mxu0 %v521
    %545 = vmatpush.msra.mxu0 %v520
    %546 = vmatpush.msra.mxu0 %v519
    %547 = vmatpush.msra.mxu0 %v518
    %548 = vmatpush.msra.mxu0 %v517
    %549 = vmatpush.msra.mxu0 %v516
    %550 = vmatpush.msra.mxu0 %v515
    %551 = vmatmul.f32.gmra.mxu0 %v499
    %v552 = vpop.f32.mrf.mxu0
    %v553 = vadd.f32 %v533, %v552
    %554 = vmatmul.f32.gmra.mxu0 %v500
    %v555 = vpop.f32.mrf.mxu0
    %v556 = vadd.f32 %v533, %v555
    %557 = vmatmul.f32.gmra.mxu0 %v501
    %v558 = vpop.f32.mrf.mxu0
    %v559 = vadd.f32 %v533, %v558
    %560 = vmatmul.f32.gmra.mxu0 %v502
    %v561 = vpop.f32.mrf.mxu0
    %v562 = vadd.f32 %v533, %v561
    %563 = vmatmul.f32.gmra.mxu0 %v503
    %v564 = vpop.f32.mrf.mxu0
    %v565 = vadd.f32 %v533, %v564
    %566 = vmatmul.f32.gmra.mxu0 %v504
    %v567 = vpop.f32.mrf.mxu0
    %v568 = vadd.f32 %v533, %v567
    %569 = vmatmul.f32.gmra.mxu0 %v505
    %v570 = vpop.f32.mrf.mxu0
    %v571 = vadd.f32 %v533, %v570
    %572 = vmatmul.f32.gmra.mxu0 %v506
    %v573 = vpop.f32.mrf.mxu0
    %v574 = vadd.f32 %v533, %v573
    %575 = vmatmul.f32.gmra.mxu0 %v507
    %v576 = vpop.f32.mrf.mxu0
    %v577 = vadd.f32 %v533, %v576
    %578 = vmatmul.f32.gmra.mxu0 %v508
    %v579 = vpop.f32.mrf.mxu0
    %v580 = vadd.f32 %v533, %v579
    %581 = vmatmul.f32.gmra.mxu0 %v509
    %v582 = vpop.f32.mrf.mxu0
    %v583 = vadd.f32 %v533, %v582
    %584 = vmatmul.f32.gmra.mxu0 %v510
    %v585 = vpop.f32.mrf.mxu0
    %v586 = vadd.f32 %v533, %v585
    %587 = vmatmul.f32.gmra.mxu0 %v511
    %v588 = vpop.f32.mrf.mxu0
    %v589 = vadd.f32 %v533, %v588
    %590 = vmatmul.f32.gmra.mxu0 %v512
    %v591 = vpop.f32.mrf.mxu0
    %v592 = vadd.f32 %v533, %v591
    %593 = vmatmul.f32.gmra.mxu0 %v513
    %v594 = vpop.f32.mrf.mxu0
    %v595 = vadd.f32 %v533, %v594
    %596 = vmatmul.f32.gmra.mxu0 %v514
    %v597 = vpop.f32.mrf.mxu0
    %v598 = vadd.f32 %v533, %v597
    %599 = vdwg.mxu0
    %v600 = vlaneseq
    %v601 = vand.u32 %v600, 127
    %vm602 = vcmp.lt.s32.totalorder %v601, 4
    %v603 = vsel %vm602, %v553, -1e+30
    %v604 = vsel %vm602, %v556, -1e+30
    %v605 = vsel %vm602, %v559, -1e+30
    %v606 = vsel %vm602, %v562, -1e+30
    %v607 = vsel %vm602, %v565, -1e+30
    %v608 = vsel %vm602, %v568, -1e+30
    %v609 = vsel %vm602, %v571, -1e+30
    %v610 = vsel %vm602, %v574, -1e+30
    %v611 = vsel %vm602, %v577, -1e+30
    %v612 = vsel %vm602, %v580, -1e+30
    %v613 = vsel %vm602, %v583, -1e+30
    %v614 = vsel %vm602, %v586, -1e+30
    %v615 = vsel %vm602, %v589, -1e+30
    %v616 = vsel %vm602, %v592, -1e+30
    %v617 = vsel %vm602, %v595, -1e+30
    %v618 = vsel %vm602, %v598, -1e+30
    %619 = vmax.xlane.f32.xlu0 %v603
    %v620 = vpop.xlane.xlu0 %619
    %621 = vmax.xlane.f32.xlu0 %v604
    %v622 = vpop.xlane.xlu0 %621
    %623 = vmax.xlane.f32.xlu0 %v605
    %v624 = vpop.xlane.xlu0 %623
    %625 = vmax.xlane.f32.xlu0 %v606
    %v626 = vpop.xlane.xlu0 %625
    %627 = vmax.xlane.f32.xlu0 %v607
    %v628 = vpop.xlane.xlu0 %627
    %629 = vmax.xlane.f32.xlu0 %v608
    %v630 = vpop.xlane.xlu0 %629
    %631 = vmax.xlane.f32.xlu0 %v609
    %v632 = vpop.xlane.xlu0 %631
    %633 = vmax.xlane.f32.xlu0 %v610
    %v634 = vpop.xlane.xlu0 %633
    %635 = vmax.xlane.f32.xlu0 %v611
    %v636 = vpop.xlane.xlu0 %635
    %637 = vmax.xlane.f32.xlu0 %v612
    %v638 = vpop.xlane.xlu0 %637
    %639 = vmax.xlane.f32.xlu0 %v613
    %v640 = vpop.xlane.xlu0 %639
    %641 = vmax.xlane.f32.xlu0 %v614
    %v642 = vpop.xlane.xlu0 %641
    %643 = vmax.xlane.f32.xlu0 %v615
    %v644 = vpop.xlane.xlu0 %643
    %645 = vmax.xlane.f32.xlu0 %v616
    %v646 = vpop.xlane.xlu0 %645
    %647 = vmax.xlane.f32.xlu0 %v617
    %v648 = vpop.xlane.xlu0 %647
    %649 = vmax.xlane.f32.xlu0 %v618
    %v650 = vpop.xlane.xlu0 %649
    %v651 = vsub.f32 %v603, %v620
    %v652 = vsub.f32 %v604, %v622
    %v653 = vsub.f32 %v605, %v624
    %v654 = vsub.f32 %v606, %v626
    %v655 = vsub.f32 %v607, %v628
    %v656 = vsub.f32 %v608, %v630
    %v657 = vsub.f32 %v609, %v632
    %v658 = vsub.f32 %v610, %v634
    %v659 = vsub.f32 %v611, %v636
    %v660 = vsub.f32 %v612, %v638
    %v661 = vsub.f32 %v613, %v640
    %v662 = vsub.f32 %v614, %v642
    %v663 = vsub.f32 %v615, %v644
    %v664 = vsub.f32 %v616, %v646
    %v665 = vsub.f32 %v617, %v648
    %v666 = vsub.f32 %v618, %v650
    %v667 = vmul.f32 %v651, 1.442695
    %v668 = vpow.pop %v667
    %v669 = vmul.f32 %v652, 1.442695
    %v670 = vpow.pop %v669
    %v671 = vmul.f32 %v653, 1.442695
    %v672 = vpow.pop %v671
    %v673 = vmul.f32 %v654, 1.442695
    %v674 = vpow.pop %v673
    %v675 = vmul.f32 %v655, 1.442695
    %v676 = vpow.pop %v675
    %v677 = vmul.f32 %v656, 1.442695
    %v678 = vpow.pop %v677
    %v679 = vmul.f32 %v657, 1.442695
    %v680 = vpow.pop %v679
    %v681 = vmul.f32 %v658, 1.442695
    %v682 = vpow.pop %v681
    %v683 = vmul.f32 %v659, 1.442695
    %v684 = vpow.pop %v683
    %v685 = vmul.f32 %v660, 1.442695
    %v686 = vpow.pop %v685
    %v687 = vmul.f32 %v661, 1.442695
    %v688 = vpow.pop %v687
    %v689 = vmul.f32 %v662, 1.442695
    %v690 = vpow.pop %v689
    %v691 = vmul.f32 %v663, 1.442695
    %v692 = vpow.pop %v691
    %v693 = vmul.f32 %v664, 1.442695
    %v694 = vpow.pop %v693
    %v695 = vmul.f32 %v665, 1.442695
    %v696 = vpow.pop %v695
    %v697 = vmul.f32 %v666, 1.442695
    %v698 = vpow.pop %v697
    %699 = vadd.xlane.f32.xlu0 %v668
    %v700 = vpop.xlane.xlu0 %699
    %701 = vadd.xlane.f32.xlu0 %v670
    %v702 = vpop.xlane.xlu0 %701
    %703 = vadd.xlane.f32.xlu0 %v672
    %v704 = vpop.xlane.xlu0 %703
    %705 = vadd.xlane.f32.xlu0 %v674
    %v706 = vpop.xlane.xlu0 %705
    %707 = vadd.xlane.f32.xlu0 %v676
    %v708 = vpop.xlane.xlu0 %707
    %709 = vadd.xlane.f32.xlu0 %v678
    %v710 = vpop.xlane.xlu0 %709
    %711 = vadd.xlane.f32.xlu0 %v680
    %v712 = vpop.xlane.xlu0 %711
    %713 = vadd.xlane.f32.xlu0 %v682
    %v714 = vpop.xlane.xlu0 %713
    %715 = vadd.xlane.f32.xlu0 %v684
    %v716 = vpop.xlane.xlu0 %715
    %717 = vadd.xlane.f32.xlu0 %v686
    %v718 = vpop.xlane.xlu0 %717
    %719 = vadd.xlane.f32.xlu0 %v688
    %v720 = vpop.xlane.xlu0 %719
    %721 = vadd.xlane.f32.xlu0 %v690
    %v722 = vpop.xlane.xlu0 %721
    %723 = vadd.xlane.f32.xlu0 %v692
    %v724 = vpop.xlane.xlu0 %723
    %725 = vadd.xlane.f32.xlu0 %v694
    %v726 = vpop.xlane.xlu0 %725
    %727 = vadd.xlane.f32.xlu0 %v696
    %v728 = vpop.xlane.xlu0 %727
    %729 = vadd.xlane.f32.xlu0 %v698
    %v730 = vpop.xlane.xlu0 %729
    %v731 = vlog2.pop %v700
    %v732 = vmul.f32 %v731, 0.6931472
    %v733 = vlog2.pop %v702
    %v734 = vmul.f32 %v733, 0.6931472
    %v735 = vlog2.pop %v704
    %v736 = vmul.f32 %v735, 0.6931472
    %v737 = vlog2.pop %v706
    %v738 = vmul.f32 %v737, 0.6931472
    %v739 = vlog2.pop %v708
    %v740 = vmul.f32 %v739, 0.6931472
    %v741 = vlog2.pop %v710
    %v742 = vmul.f32 %v741, 0.6931472
    %v743 = vlog2.pop %v712
    %v744 = vmul.f32 %v743, 0.6931472
    %v745 = vlog2.pop %v714
    %v746 = vmul.f32 %v745, 0.6931472
    %v747 = vlog2.pop %v716
    %v748 = vmul.f32 %v747, 0.6931472
    %v749 = vlog2.pop %v718
    %v750 = vmul.f32 %v749, 0.6931472
    %v751 = vlog2.pop %v720
    %v752 = vmul.f32 %v751, 0.6931472
    %v753 = vlog2.pop %v722
    %v754 = vmul.f32 %v753, 0.6931472
    %v755 = vlog2.pop %v724
    %v756 = vmul.f32 %v755, 0.6931472
    %v757 = vlog2.pop %v726
    %v758 = vmul.f32 %v757, 0.6931472
    %v759 = vlog2.pop %v728
    %v760 = vmul.f32 %v759, 0.6931472
    %v761 = vlog2.pop %v730
    %v762 = vmul.f32 %v761, 0.6931472
    %v763 = vadd.f32 %v620, %v732
    %v764 = vadd.f32 %v622, %v734
    %v765 = vadd.f32 %v624, %v736
    %v766 = vadd.f32 %v626, %v738
    %v767 = vadd.f32 %v628, %v740
    %v768 = vadd.f32 %v630, %v742
    %v769 = vadd.f32 %v632, %v744
    %v770 = vadd.f32 %v634, %v746
    %v771 = vadd.f32 %v636, %v748
    %v772 = vadd.f32 %v638, %v750
    %v773 = vadd.f32 %v640, %v752
    %v774 = vadd.f32 %v642, %v754
    %v775 = vadd.f32 %v644, %v756
    %v776 = vadd.f32 %v646, %v758
    %v777 = vadd.f32 %v648, %v760
    %v778 = vadd.f32 %v650, %v762
    %v779 = vsub.f32 %v603, %v763
    %v780 = vsub.f32 %v604, %v764
    %v781 = vsub.f32 %v605, %v765
    %v782 = vsub.f32 %v606, %v766
    %v783 = vsub.f32 %v607, %v767
    %v784 = vsub.f32 %v608, %v768
    %v785 = vsub.f32 %v609, %v769
    %v786 = vsub.f32 %v610, %v770
    %v787 = vsub.f32 %v611, %v771
    %v788 = vsub.f32 %v612, %v772
    %v789 = vsub.f32 %v613, %v773
    %v790 = vsub.f32 %v614, %v774
    %v791 = vsub.f32 %v615, %v775
    %v792 = vsub.f32 %v616, %v776
    %v793 = vsub.f32 %v617, %v777
    %v794 = vsub.f32 %v618, %v778
    %795 = vst [vmem:[#allocation8] sm:$0xff] %v779
    %796 = vst [vmem:[#allocation8 + $0x8] sm:$0xff] %v780
    %797 = vst [vmem:[#allocation8 + $0x10] sm:$0xff] %v781
    %798 = vst [vmem:[#allocation8 + $0x18] sm:$0xff] %v782
    %799 = vst [vmem:[#allocation8 + $0x20] sm:$0xff] %v783
    %800 = vst [vmem:[#allocation8 + $0x28] sm:$0xff] %v784
    %801 = vst [vmem:[#allocation8 + $0x30] sm:$0xff] %v785
    %802 = vst [vmem:[#allocation8 + $0x38] sm:$0xff] %v786
    %803 = vst [vmem:[#allocation8 + $0x40] sm:$0xff] %v787
    %804 = vst [vmem:[#allocation8 + $0x48] sm:$0xff] %v788
    %805 = vst [vmem:[#allocation8 + $0x50] sm:$0xff] %v789
    %806 = vst [vmem:[#allocation8 + $0x58] sm:$0xff] %v790
    %807 = vst [vmem:[#allocation8 + $0x60] sm:$0xff] %v791
    %808 = vst [vmem:[#allocation8 + $0x68] sm:$0xff] %v792
    %809 = vst [vmem:[#allocation8 + $0x70] sm:$0xff] %v793
    %810 = vst [vmem:[#allocation8 + $0x78] sm:$0xff] %v794
    // Predicated region
    $region30: #{tpu_custom_call.1} parent=1 // pred_check
      _
    $region31: #{tpu_custom_call.1} parent=1 // pred_check_branch
      %812 = sbr.rel (0) target = $region33
    $region32: #{tpu_custom_call.1} parent=1 // pred_region
      %814 = vsyncadd [#allocation4], 0
      %s815 = sshll.u32 [#allocation8], 4
      %s816 = int_to_ptr.vmem [resolvable:$true] %s815
      %s817 = sshll.u32 %s4, 4
      %s818 = int_to_ptr.hbm [resolvable:$true] %s817
      %823 = dma.vmem_to_hbm [thread:$0]  %s816, 2048, %s818, [#allocation4], 128, 128, 8
    $region33: #{tpu_custom_call.1} parent=1 // pred_fallthru
      _
    // Predicated region
    $region34: #{tpu_custom_call.1} parent=1 // pred_check
      _
    $region35: #{tpu_custom_call.1} parent=1 // pred_check_branch
      %825 = sbr.rel (0) target = $region37
    $region36: #{tpu_custom_call.1} parent=1 // pred_region
      %827 = dma.done [#allocation4], 2048
    $region37: #{tpu_custom_call.1} parent=1 // pred_fallthru
      _
    %828 = vsyncpa [#allocation3], 1
    %829 = vsyncpa [#allocation6], 1
    %830 = vsyncpa [#allocation4], 1

</llo_original>
